<compile_context>
chip_gen: v6e
topology: v6e:2x2x1
jax: 0.10.0
libtpu: 0.0.40
codegen_flags: <defaults>
</compile_context>

<pallas_src>
import jax
import jax.numpy as jnp
import numpy as np
from jax.experimental import pallas as pl
from jax.experimental.pallas import tpu as pltpu


def _classify2_kernel(
    x_ref, y_ref,
    w00_ref, s00_ref, b00_ref,
    w01_ref, s01_ref, b01_ref,
    w1x_ref, w1y_ref, s1_ref, b1_ref,
    w2_ref, s2_ref, b2_ref,
    w3_ref,
    o_ref,
):
    BB, M, C = y_ref.shape
    _, N, _ = x_ref.shape
    C1 = w1x_ref.shape[1]
    C2 = w2_ref.shape[1]
    mxu_dt = w00_ref.dtype          # bf16 (default) or f32

    # --- y branch: conv00/bn00/relu -> conv01/bn01/relu -> max over points ---
    # Fold the BB batches onto the sublane axis so each matmul has BB*M rows.
    yf = y_ref[...].reshape(BB * M, C)
    z = jnp.dot(yf, w00_ref[...], preferred_element_type=jnp.float32)
    z = jnp.maximum(z * s00_ref[...] + b00_ref[...], 0.0)           # bn00 + relu (f32)
    z = jnp.dot(z.astype(mxu_dt), w01_ref[...],
                preferred_element_type=jnp.float32)
    z = jnp.maximum(z * s01_ref[...] + b01_ref[...], 0.0)           # bn01 + relu (f32)
    ymax = jnp.max(z.reshape(BB, M, C), axis=1)                     # (BB, C) per-batch max

    # --- conv1 without the concat: x @ w1[:C] + broadcast(ymax @ w1[C:]) -----
    bias1 = jnp.dot(ymax.astype(mxu_dt), w1y_ref[...],
                    preferred_element_type=jnp.float32)             # (BB, C1)
    xf = x_ref[...].reshape(BB * N, C)
    h = jnp.dot(xf, w1x_ref[...], preferred_element_type=jnp.float32)
    h = h.reshape(BB, N, C1) + bias1[:, None, :]                    # per-batch rank-1 term
    h = jnp.maximum(h * s1_ref[...] + b1_ref[...], 0.0)             # bn1 + relu (f32)

    # --- conv2 / bn2 / relu ---------------------------------------------------
    h = jnp.dot(h.reshape(BB * N, C1).astype(mxu_dt), w2_ref[...],
                preferred_element_type=jnp.float32)
    h = jnp.maximum(h * s2_ref[...] + b2_ref[...], 0.0)             # (BB*N, C2), f32

    # --- conv3 (Cout == 1): VPU multiply + lane reduction, then sigmoid ------
    # Avoids a 1-column MXU pass and produces a lane-dense (BB, N) result.
    logits = jnp.sum(h.reshape(BB, N, C2) * w3_ref[...], axis=-1)   # (BB, N)
    o_ref[...] = jax.nn.sigmoid(logits)


def classify2_pallas(x_bcn, y_bcm, params, *, mxu_dtype=jnp.bfloat16,
                     batches_per_program=None):
    """x_bcn: (B, C, N), y_bcm: (B, C, M) — the PyTorch Conv1d layout.

    Returns (B, N, 1), matching the module's `.permute(0, 2, 1)` output.
    """
    B, C, N = x_bcn.shape
    _, _, M = y_bcm.shape
    (w00, s00, b00, w01, s01, b01, w1, s1, b1, w2, s2, b2, w3) = params
    C1 = w1.shape[1]    # 256
    C2 = w2.shape[1]    # 128

    # Collapse the batch grid for small B (per-grid-step overhead ~0.35 us).
    BB = B if batches_per_program is None else batches_per_program
    assert B % BB == 0 and (BB == B or BB % 8 == 0), "pick BB == B or a multiple of 8"

    cast = lambda a: a.astype(mxu_dtype)

    # Boundary layout plumbing: channels-last activations, bf16 MXU operands.
    x_bnc = cast(jnp.transpose(x_bcn, (0, 2, 1)))
    y_bmc = cast(jnp.transpose(y_bcm, (0, 2, 1)))

    # Split conv1's weight so the kernel never materializes the (N, 2C) concat:
    #   concat([x, ymax_bcast], -1) @ w1  ==  x @ w1[:C] + broadcast(ymax @ w1[C:])
    w1x, w1y = cast(w1[:C]), cast(w1[C:])
    # conv3 weight as a (1, C2) f32 row: applied on the VPU, never hits the MXU.
    w3_row = jnp.reshape(w3, (1, C2)).astype(jnp.float32)

    def full_spec(shape):
        nd = len(shape)
        return pl.BlockSpec(shape, lambda b, _nd=nd: (0,) * _nd)

    in_specs = [
        pl.BlockSpec((BB, N, C), lambda b: (b, 0, 0)),   # x
        pl.BlockSpec((BB, M, C), lambda b: (b, 0, 0)),   # y
        full_spec((C, C)),  full_spec((1, C)),  full_spec((1, C)),    # conv00 / bn00
        full_spec((C, C)),  full_spec((1, C)),  full_spec((1, C)),    # conv01 / bn01
        full_spec((C, C1)), full_spec((C, C1)),                       # conv1 split
        full_spec((1, C1)), full_spec((1, C1)),                       # bn1
        full_spec((C1, C2)), full_spec((1, C2)), full_spec((1, C2)),  # conv2 / bn2
        full_spec((1, C2)),                                           # conv3 row
    ]

    out = pl.pallas_call(
        _classify2_kernel,
        out_shape=jax.ShapeDtypeStruct((B, N), jnp.float32),
        grid_spec=pltpu.PrefetchScalarGridSpec(
            num_scalar_prefetch=0,
            grid=(B // BB,),
            in_specs=in_specs,
            # Lane-dense output: N sits on the lane axis (no width-1 vst.msk).
            out_specs=pl.BlockSpec((BB, N), lambda b: (b, 0)),
        ),
        compiler_params=pltpu.CompilerParams(
            dimension_semantics=("parallel",)),
    )(x_bnc, y_bmc,
      cast(w00), s00, b00,
      cast(w01), s01, b01,
      w1x, w1y, s1, b1,
      cast(w2), s2, b2,
      w3_row)

    return out[..., None]        # (B, N, 1) — free metadata reshape in XLA


def _bn_fold(gamma, beta, mean, var, eps=1e-5):
    """Eval-mode BatchNorm1d folded to per-channel scale/shift (shape (1, C))."""
    scale = gamma / jnp.sqrt(var + eps)
    shift = beta - mean * scale
    return scale[None, :], shift[None, :]


def make_params(key, emb_dims):
    """Deterministic parameter init mirroring the module's __init__ shapes.

    Conv weights are stored transposed (Cin, Cout) so the kernel does h @ W.
    """
    ks = jax.random.split(key, 16)
    C, C1, C2 = emb_dims, 256, 128

    def conv_w(k, cin, cout):
        return (jax.random.normal(k, (cin, cout), jnp.float32)
                * (2.0 / cin) ** 0.5)

    def bn(k, c):
        k1, k2, k3, k4 = jax.random.split(k, 4)
        gamma = 1.0 + 0.1 * jax.random.normal(k1, (c,), jnp.float32)
        beta = 0.1 * jax.random.normal(k2, (c,), jnp.float32)
        mean = 0.1 * jax.random.normal(k3, (c,), jnp.float32)
        var = 0.5 + jax.random.uniform(k4, (c,), jnp.float32)
        return _bn_fold(gamma, beta, mean, var)

    w00 = conv_w(ks[0], C, C)
    s00, b00 = bn(ks[1], C)
    w01 = conv_w(ks[2], C, C)
    s01, b01 = bn(ks[3], C)
    w1 = conv_w(ks[4], 2 * C, C1)
    s1, b1 = bn(ks[5], C1)
    w2 = conv_w(ks[6], C1, C2)
    s2, b2 = bn(ks[7], C2)
    w3 = conv_w(ks[8], C2, 1)
    return (w00, s00, b00, w01, s01, b01, w1, s1, b1, w2, s2, b2, w3)


def classify2_ref(x_bnc, y_bmc, params, mxu_dtype=jnp.bfloat16):
    """Pure-JAX reference (channels-last), mirroring the kernel's MXU casts.

    Uses the original concat formulation for conv1 (validating the split) and
    an element-wise f32 reduction for conv3 (matching the kernel's VPU path).
    """
    (w00, s00, b00, w01, s01, b01, w1, s1, b1, w2, s2, b2, w3) = params
    f32 = jnp.float32
    cast = lambda a: a.astype(mxu_dtype)
    z = jnp.einsum("bmc,cd->bmd", cast(y_bmc), cast(w00), preferred_element_type=f32)
    z = jnp.maximum(z * s00 + b00, 0.0)
    z = jnp.einsum("bmc,cd->bmd", cast(z), cast(w01), preferred_element_type=f32)
    z = jnp.maximum(z * s01 + b01, 0.0)
    ymax = jnp.broadcast_to(jnp.max(z, axis=1, keepdims=True), x_bnc.shape)
    h = jnp.concatenate([x_bnc, ymax], axis=-1)
    h = jnp.einsum("bnc,cd->bnd", cast(h), cast(w1), preferred_element_type=f32)
    h = jnp.maximum(h * s1 + b1, 0.0)
    h = jnp.einsum("bnc,cd->bnd", cast(h), cast(w2), preferred_element_type=f32)
    h = jnp.maximum(h * s2 + b2, 0.0)
    logits = jnp.sum(h * w3.reshape(1, 1, -1), axis=-1, keepdims=True)
    return jax.nn.sigmoid(logits)        # (B, N, 1)


if __name__ == "__main__":
    # Small shapes consistent with the module: batch=2, emb_dims=32,
    # num_points=16.  PyTorch would take x, y of shape (2, 32, 16) [B, C, N].
    B, C, N, M = 2, 32, 16, 16
    key = jax.random.PRNGKey(0)
    kx, ky, kp = jax.random.split(key, 3)

    x_bcn = jax.random.normal(kx, (B, C, N), jnp.float32)   # PyTorch layout
    y_bcm = jax.random.normal(ky, (B, C, M), jnp.float32)
    params = make_params(kp, C)

    x_bnc = jnp.transpose(x_bcn, (0, 2, 1))
    y_bmc = jnp.transpose(y_bcm, (0, 2, 1))

    # f32 MXU path: tight check against the pure-JAX f32 reference.
    out_f32 = jax.block_until_ready(
        classify2_pallas(x_bcn, y_bcm, params, mxu_dtype=jnp.float32))
    ref_f32 = jax.block_until_ready(classify2_ref(x_bnc, y_bmc, params, jnp.float32))
    assert out_f32.shape == (B, N, 1)
    np.testing.assert_allclose(np.asarray(out_f32), np.asarray(ref_f32),
                               rtol=1e-4, atol=1e-4)

    # bf16 MXU path (default; v6e/v7x feedback): compare against a reference
    # that applies the same bf16 casts to the matmul operands.
    out_bf16 = jax.block_until_ready(classify2_pallas(x_bcn, y_bcm, params))
    ref_bf16 = jax.block_until_ready(classify2_ref(x_bnc, y_bmc, params, jnp.bfloat16))
    assert out_bf16.shape == (B, N, 1)
    np.testing.assert_allclose(np.asarray(out_bf16), np.asarray(ref_bf16),
                               rtol=1e-2, atol=1e-2)

    # TODO(synk): the PyTorch forward only *prints* on NaN; no output effect.
    assert not bool(jnp.any(jnp.isnan(out_bf16)))
    print("KERNEL_OK")
</pallas_src>

<mosaic_0001>
module attributes {stable_mosaic.version = 11 : i64} {
  func.func @_classify2_kernel(%arg0: i32, %arg1: memref<2x16x32xf32, #tpu.memory_space<vmem>>, %arg2: memref<2x16x32xf32, #tpu.memory_space<vmem>>, %arg3: memref<32x32xf32, #tpu.memory_space<vmem>>, %arg4: memref<1x32xf32, #tpu.memory_space<vmem>>, %arg5: memref<1x32xf32, #tpu.memory_space<vmem>>, %arg6: memref<32x32xf32, #tpu.memory_space<vmem>>, %arg7: memref<1x32xf32, #tpu.memory_space<vmem>>, %arg8: memref<1x32xf32, #tpu.memory_space<vmem>>, %arg9: memref<32x256xf32, #tpu.memory_space<vmem>>, %arg10: memref<32x256xf32, #tpu.memory_space<vmem>>, %arg11: memref<1x256xf32, #tpu.memory_space<vmem>>, %arg12: memref<1x256xf32, #tpu.memory_space<vmem>>, %arg13: memref<256x128xf32, #tpu.memory_space<vmem>>, %arg14: memref<1x128xf32, #tpu.memory_space<vmem>>, %arg15: memref<1x128xf32, #tpu.memory_space<vmem>>, %arg16: memref<1x128xf32, #tpu.memory_space<vmem>>, %arg17: memref<2x16xf32, #tpu.memory_space<vmem>>) attributes {dimension_semantics = [#tpu.dimension_semantics<parallel>], iteration_bounds = array<i64: 1>, scalar_prefetch = 0 : i64, scratch_operands = 0 : i64, tpu.core_type = #tpu.core_type<tc>, window_params = [{transform_indices = @transform_0, window_bounds = array<i64: 2, 16, 32>}, {transform_indices = @transform_1, window_bounds = array<i64: 2, 16, 32>}, {pipeline_mode = #tpu.pipeline_mode<synchronous>, transform_indices = @transform_2, window_bounds = array<i64: 32, 32>}, {pipeline_mode = #tpu.pipeline_mode<synchronous>, transform_indices = @transform_3, window_bounds = array<i64: 1, 32>}, {pipeline_mode = #tpu.pipeline_mode<synchronous>, transform_indices = @transform_4, window_bounds = array<i64: 1, 32>}, {pipeline_mode = #tpu.pipeline_mode<synchronous>, transform_indices = @transform_5, window_bounds = array<i64: 32, 32>}, {pipeline_mode = #tpu.pipeline_mode<synchronous>, transform_indices = @transform_6, window_bounds = array<i64: 1, 32>}, {pipeline_mode = #tpu.pipeline_mode<synchronous>, transform_indices = @transform_7, window_bounds = array<i64: 1, 32>}, {pipeline_mode = #tpu.pipeline_mode<synchronous>, transform_indices = @transform_8, window_bounds = array<i64: 32, 256>}, {pipeline_mode = #tpu.pipeline_mode<synchronous>, transform_indices = @transform_9, window_bounds = array<i64: 32, 256>}, {pipeline_mode = #tpu.pipeline_mode<synchronous>, transform_indices = @transform_10, window_bounds = array<i64: 1, 256>}, {pipeline_mode = #tpu.pipeline_mode<synchronous>, transform_indices = @transform_11, window_bounds = array<i64: 1, 256>}, {pipeline_mode = #tpu.pipeline_mode<synchronous>, transform_indices = @transform_12, window_bounds = array<i64: 256, 128>}, {pipeline_mode = #tpu.pipeline_mode<synchronous>, transform_indices = @transform_13, window_bounds = array<i64: 1, 128>}, {pipeline_mode = #tpu.pipeline_mode<synchronous>, transform_indices = @transform_14, window_bounds = array<i64: 1, 128>}, {pipeline_mode = #tpu.pipeline_mode<synchronous>, transform_indices = @transform_15, window_bounds = array<i64: 1, 128>}, {transform_indices = @transform_16, window_bounds = array<i64: 2, 16>}]} {
    %c0 = arith.constant 0 : index
    %c0_0 = arith.constant 0 : index
    %c0_1 = arith.constant 0 : index
    %0 = vector.load %arg2[%c0, %c0_0, %c0_1] : memref<2x16x32xf32, #tpu.memory_space<vmem>>, vector<2x16x32xf32>
    %1 = vector.shape_cast %0 : vector<2x16x32xf32> to vector<32x32xf32>
    %c0_2 = arith.constant 0 : index
    %c0_3 = arith.constant 0 : index
    %2 = vector.load %arg3[%c0_2, %c0_3] : memref<32x32xf32, #tpu.memory_space<vmem>>, vector<32x32xf32>
    %cst = arith.constant dense<0.000000e+00> : vector<32x32xf32>
    %3 = tpu.matmul %1, %2, %cst {dimension_numbers = #tpu.dot_dimension_numbers<[1], [0], [0], [1], [0, 0, 1, 1], [], []>} : vector<32x32xf32>, vector<32x32xf32>, vector<32x32xf32> -> vector<32x32xf32>
    %c0_4 = arith.constant 0 : index
    %c0_5 = arith.constant 0 : index
    %4 = vector.load %arg4[%c0_4, %c0_5] : memref<1x32xf32, #tpu.memory_space<vmem>>, vector<1x32xf32>
    %5 = vector.broadcast %4 : vector<1x32xf32> to vector<32x32xf32>
    %6 = arith.mulf %3, %5 : vector<32x32xf32>
    %c0_6 = arith.constant 0 : index
    %c0_7 = arith.constant 0 : index
    %7 = vector.load %arg5[%c0_6, %c0_7] : memref<1x32xf32, #tpu.memory_space<vmem>>, vector<1x32xf32>
    %8 = vector.broadcast %7 : vector<1x32xf32> to vector<32x32xf32>
    %9 = arith.addf %6, %8 : vector<32x32xf32>
    %cst_8 = arith.constant 0.000000e+00 : f32
    %10 = vector.broadcast %cst_8 : f32 to vector<32x32xf32>
    %11 = arith.maximumf %9, %10 : vector<32x32xf32>
    %c0_9 = arith.constant 0 : index
    %c0_10 = arith.constant 0 : index
    %12 = vector.load %arg6[%c0_9, %c0_10] : memref<32x32xf32, #tpu.memory_space<vmem>>, vector<32x32xf32>
    %cst_11 = arith.constant dense<0.000000e+00> : vector<32x32xf32>
    %13 = tpu.matmul %11, %12, %cst_11 {dimension_numbers = #tpu.dot_dimension_numbers<[1], [0], [0], [1], [0, 0, 1, 1], [], []>} : vector<32x32xf32>, vector<32x32xf32>, vector<32x32xf32> -> vector<32x32xf32>
    %c0_12 = arith.constant 0 : index
    %c0_13 = arith.constant 0 : index
    %14 = vector.load %arg7[%c0_12, %c0_13] : memref<1x32xf32, #tpu.memory_space<vmem>>, vector<1x32xf32>
    %15 = vector.broadcast %14 : vector<1x32xf32> to vector<32x32xf32>
    %16 = arith.mulf %13, %15 : vector<32x32xf32>
    %c0_14 = arith.constant 0 : index
    %c0_15 = arith.constant 0 : index
    %17 = vector.load %arg8[%c0_14, %c0_15] : memref<1x32xf32, #tpu.memory_space<vmem>>, vector<1x32xf32>
    %18 = vector.broadcast %17 : vector<1x32xf32> to vector<32x32xf32>
    %19 = arith.addf %16, %18 : vector<32x32xf32>
    %cst_16 = arith.constant 0.000000e+00 : f32
    %20 = vector.broadcast %cst_16 : f32 to vector<32x32xf32>
    %21 = arith.maximumf %19, %20 : vector<32x32xf32>
    %22 = vector.shape_cast %21 : vector<32x32xf32> to vector<2x16x32xf32>
    %cst_17 = arith.constant dense<0xFF800000> : vector<2x32xf32>
    %23 = vector.multi_reduction <maximumf>, %22, %cst_17 [1] : vector<2x16x32xf32> to vector<2x32xf32>
    %c0_18 = arith.constant 0 : index
    %c0_19 = arith.constant 0 : index
    %24 = vector.load %arg10[%c0_18, %c0_19] : memref<32x256xf32, #tpu.memory_space<vmem>>, vector<32x256xf32>
    %cst_20 = arith.constant dense<0.000000e+00> : vector<2x256xf32>
    %25 = tpu.matmul %23, %24, %cst_20 {dimension_numbers = #tpu.dot_dimension_numbers<[1], [0], [0], [1], [0, 0, 1, 1], [], []>} : vector<2x32xf32>, vector<32x256xf32>, vector<2x256xf32> -> vector<2x256xf32>
    %c0_21 = arith.constant 0 : index
    %c0_22 = arith.constant 0 : index
    %c0_23 = arith.constant 0 : index
    %26 = vector.load %arg1[%c0_21, %c0_22, %c0_23] : memref<2x16x32xf32, #tpu.memory_space<vmem>>, vector<2x16x32xf32>
    %27 = vector.shape_cast %26 : vector<2x16x32xf32> to vector<32x32xf32>
    %c0_24 = arith.constant 0 : index
    %c0_25 = arith.constant 0 : index
    %28 = vector.load %arg9[%c0_24, %c0_25] : memref<32x256xf32, #tpu.memory_space<vmem>>, vector<32x256xf32>
    %cst_26 = arith.constant dense<0.000000e+00> : vector<32x256xf32>
    %29 = tpu.matmul %27, %28, %cst_26 {dimension_numbers = #tpu.dot_dimension_numbers<[1], [0], [0], [1], [0, 0, 1, 1], [], []>} : vector<32x32xf32>, vector<32x256xf32>, vector<32x256xf32> -> vector<32x256xf32>
    %30 = vector.shape_cast %29 : vector<32x256xf32> to vector<2x16x256xf32>
    %31 = vector.shape_cast %25 : vector<2x256xf32> to vector<2x1x256xf32>
    %32 = vector.broadcast %31 : vector<2x1x256xf32> to vector<2x16x256xf32>
    %33 = arith.addf %30, %32 : vector<2x16x256xf32>
    %c0_27 = arith.constant 0 : index
    %c0_28 = arith.constant 0 : index
    %34 = vector.load %arg11[%c0_27, %c0_28] : memref<1x256xf32, #tpu.memory_space<vmem>>, vector<1x256xf32>
    %35 = vector.shape_cast %34 : vector<1x256xf32> to vector<1x1x256xf32>
    %36 = vector.broadcast %35 : vector<1x1x256xf32> to vector<2x16x256xf32>
    %37 = arith.mulf %33, %36 : vector<2x16x256xf32>
    %c0_29 = arith.constant 0 : index
    %c0_30 = arith.constant 0 : index
    %38 = vector.load %arg12[%c0_29, %c0_30] : memref<1x256xf32, #tpu.memory_space<vmem>>, vector<1x256xf32>
    %39 = vector.shape_cast %38 : vector<1x256xf32> to vector<1x1x256xf32>
    %40 = vector.broadcast %39 : vector<1x1x256xf32> to vector<2x16x256xf32>
    %41 = arith.addf %37, %40 : vector<2x16x256xf32>
    %cst_31 = arith.constant 0.000000e+00 : f32
    %42 = vector.broadcast %cst_31 : f32 to vector<2x16x256xf32>
    %43 = arith.maximumf %41, %42 : vector<2x16x256xf32>
    %44 = vector.shape_cast %43 : vector<2x16x256xf32> to vector<32x256xf32>
    %c0_32 = arith.constant 0 : index
    %c0_33 = arith.constant 0 : index
    %45 = vector.load %arg13[%c0_32, %c0_33] : memref<256x128xf32, #tpu.memory_space<vmem>>, vector<256x128xf32>
    %cst_34 = arith.constant dense<0.000000e+00> : vector<32x128xf32>
    %46 = tpu.matmul %44, %45, %cst_34 {dimension_numbers = #tpu.dot_dimension_numbers<[1], [0], [0], [1], [0, 0, 1, 1], [], []>} : vector<32x256xf32>, vector<256x128xf32>, vector<32x128xf32> -> vector<32x128xf32>
    %c0_35 = arith.constant 0 : index
    %c0_36 = arith.constant 0 : index
    %47 = vector.load %arg14[%c0_35, %c0_36] : memref<1x128xf32, #tpu.memory_space<vmem>>, vector<1x128xf32>
    %48 = vector.broadcast %47 : vector<1x128xf32> to vector<32x128xf32>
    %49 = arith.mulf %46, %48 : vector<32x128xf32>
    %c0_37 = arith.constant 0 : index
    %c0_38 = arith.constant 0 : index
    %50 = vector.load %arg15[%c0_37, %c0_38] : memref<1x128xf32, #tpu.memory_space<vmem>>, vector<1x128xf32>
    %51 = vector.broadcast %50 : vector<1x128xf32> to vector<32x128xf32>
    %52 = arith.addf %49, %51 : vector<32x128xf32>
    %cst_39 = arith.constant 0.000000e+00 : f32
    %53 = vector.broadcast %cst_39 : f32 to vector<32x128xf32>
    %54 = arith.maximumf %52, %53 : vector<32x128xf32>
    %55 = vector.shape_cast %54 : vector<32x128xf32> to vector<2x16x128xf32>
    %c0_40 = arith.constant 0 : index
    %c0_41 = arith.constant 0 : index
    %56 = vector.load %arg16[%c0_40, %c0_41] : memref<1x128xf32, #tpu.memory_space<vmem>>, vector<1x128xf32>
    %57 = vector.shape_cast %56 : vector<1x128xf32> to vector<1x1x128xf32>
    %58 = vector.broadcast %57 : vector<1x1x128xf32> to vector<2x16x128xf32>
    %59 = arith.mulf %55, %58 : vector<2x16x128xf32>
    %cst_42 = arith.constant dense<0.000000e+00> : vector<2x16xf32>
    %60 = vector.multi_reduction <add>, %59, %cst_42 [2] : vector<2x16x128xf32> to vector<2x16xf32>
    %61 = arith.negf %60 : vector<2x16xf32>
    %62 = math.exp %61 : vector<2x16xf32>
    %cst_43 = arith.constant 1.000000e+00 : f32
    %63 = vector.broadcast %cst_43 : f32 to vector<2x16xf32>
    %64 = arith.addf %63, %62 : vector<2x16xf32>
    %65 = arith.divf %63, %64 : vector<2x16xf32>
    %c0_44 = arith.constant 0 : index
    %c0_45 = arith.constant 0 : index
    %66 = vector.load %arg17[%c0_44, %c0_45] : memref<2x16xf32, #tpu.memory_space<vmem>>, vector<2x16xf32>
    tpu.vector_store %arg17[%c0_44, %c0_45], %65 {strides = array<i32>} : memref<2x16xf32, #tpu.memory_space<vmem>>, vector<2x16xf32>,
    return
  }
  func.func @transform_0(%arg0: i32) -> (i32, i32, i32) {
    %c0_i32 = arith.constant 0 : i32
    %c0_i32_0 = arith.constant 0 : i32
    %c0_i32_1 = arith.constant 0 : i32
    return %arg0, %c0_i32, %c0_i32_0 : i32, i32, i32
  }
  func.func @transform_1(%arg0: i32) -> (i32, i32, i32) {
    %c0_i32 = arith.constant 0 : i32
    %c0_i32_0 = arith.constant 0 : i32
    %c0_i32_1 = arith.constant 0 : i32
    return %arg0, %c0_i32, %c0_i32_0 : i32, i32, i32
  }
  func.func @transform_2(%arg0: i32) -> (i32, i32) {
    %c0_i32 = arith.constant 0 : i32
    %c0_i32_0 = arith.constant 0 : i32
    %c0_i32_1 = arith.constant 0 : i32
    return %c0_i32, %c0_i32_0 : i32, i32
  }
  func.func @transform_3(%arg0: i32) -> (i32, i32) {
    %c0_i32 = arith.constant 0 : i32
    %c0_i32_0 = arith.constant 0 : i32
    %c0_i32_1 = arith.constant 0 : i32
    return %c0_i32, %c0_i32_0 : i32, i32
  }
  func.func @transform_4(%arg0: i32) -> (i32, i32) {
    %c0_i32 = arith.constant 0 : i32
    %c0_i32_0 = arith.constant 0 : i32
    %c0_i32_1 = arith.constant 0 : i32
    return %c0_i32, %c0_i32_0 : i32, i32
  }
  func.func @transform_5(%arg0: i32) -> (i32, i32) {
    %c0_i32 = arith.constant 0 : i32
    %c0_i32_0 = arith.constant 0 : i32
    %c0_i32_1 = arith.constant 0 : i32
    return %c0_i32, %c0_i32_0 : i32, i32
  }
  func.func @transform_6(%arg0: i32) -> (i32, i32) {
    %c0_i32 = arith.constant 0 : i32
    %c0_i32_0 = arith.constant 0 : i32
    %c0_i32_1 = arith.constant 0 : i32
    return %c0_i32, %c0_i32_0 : i32, i32
  }
  func.func @transform_7(%arg0: i32) -> (i32, i32) {
    %c0_i32 = arith.constant 0 : i32
    %c0_i32_0 = arith.constant 0 : i32
    %c0_i32_1 = arith.constant 0 : i32
    return %c0_i32, %c0_i32_0 : i32, i32
  }
  func.func @transform_8(%arg0: i32) -> (i32, i32) {
    %c0_i32 = arith.constant 0 : i32
    %c0_i32_0 = arith.constant 0 : i32
    %c0_i32_1 = arith.constant 0 : i32
    return %c0_i32, %c0_i32_0 : i32, i32
  }
  func.func @transform_9(%arg0: i32) -> (i32, i32) {
    %c0_i32 = arith.constant 0 : i32
    %c0_i32_0 = arith.constant 0 : i32
    %c0_i32_1 = arith.constant 0 : i32
    return %c0_i32, %c0_i32_0 : i32, i32
  }
  func.func @transform_10(%arg0: i32) -> (i32, i32) {
    %c0_i32 = arith.constant 0 : i32
    %c0_i32_0 = arith.constant 0 : i32
    %c0_i32_1 = arith.constant 0 : i32
    return %c0_i32, %c0_i32_0 : i32, i32
  }
  func.func @transform_11(%arg0: i32) -> (i32, i32) {
    %c0_i32 = arith.constant 0 : i32
    %c0_i32_0 = arith.constant 0 : i32
    %c0_i32_1 = arith.constant 0 : i32
    return %c0_i32, %c0_i32_0 : i32, i32
  }
  func.func @transform_12(%arg0: i32) -> (i32, i32) {
    %c0_i32 = arith.constant 0 : i32
    %c0_i32_0 = arith.constant 0 : i32
    %c0_i32_1 = arith.constant 0 : i32
    return %c0_i32, %c0_i32_0 : i32, i32
  }
  func.func @transform_13(%arg0: i32) -> (i32, i32) {
    %c0_i32 = arith.constant 0 : i32
    %c0_i32_0 = arith.constant 0 : i32
    %c0_i32_1 = arith.constant 0 : i32
    return %c0_i32, %c0_i32_0 : i32, i32
  }
  func.func @transform_14(%arg0: i32) -> (i32, i32) {
    %c0_i32 = arith.constant 0 : i32
    %c0_i32_0 = arith.constant 0 : i32
    %c0_i32_1 = arith.constant 0 : i32
    return %c0_i32, %c0_i32_0 : i32, i32
  }
  func.func @transform_15(%arg0: i32) -> (i32, i32) {
    %c0_i32 = arith.constant 0 : i32
    %c0_i32_0 = arith.constant 0 : i32
    %c0_i32_1 = arith.constant 0 : i32
    return %c0_i32, %c0_i32_0 : i32, i32
  }
  func.func @transform_16(%arg0: i32) -> (i32, i32) {
    %c0_i32 = arith.constant 0 : i32
    %c0_i32_0 = arith.constant 0 : i32
    return %arg0, %c0_i32 : i32, i32
  }
}

</mosaic_0001>

<llo_original>
// kernel: tpu_custom_call.1
$region0: #{tpu_custom_call.1}
  #allocation0 [shape = 'u32[]', space=smem, size = 0x4, offset = 0x4, fixed_abs, tag = 'smem constant byte address 0x4 - core index']
  #allocation1 [shape = 'u32[144,128]{1,0:T(1,128)}', space=vmem, size = 0x12000, scoped, tag = 'internal scratch']
  %s0 = inlined_call_operand.hbm [shape: f32[2,16,32], index: 0, kind: input, shape index: {}]
  %s1 = inlined_call_operand.hbm [shape: f32[2,16,32], index: 1, kind: input, shape index: {}]
  %s2 = inlined_call_operand.hbm [shape: f32[32,32], index: 2, kind: input, shape index: {}]
  %s3 = inlined_call_operand.vmem [shape: f32[1,32], index: 3, kind: input, shape index: {}]
  %s4 = inlined_call_operand.vmem [shape: f32[1,32], index: 4, kind: input, shape index: {}]
  %s5 = inlined_call_operand.hbm [shape: f32[32,32], index: 5, kind: input, shape index: {}]
  %s6 = inlined_call_operand.vmem [shape: f32[1,32], index: 6, kind: input, shape index: {}]
  %s7 = inlined_call_operand.vmem [shape: f32[1,32], index: 7, kind: input, shape index: {}]
  %s8 = inlined_call_operand.hbm [shape: f32[32,256], index: 8, kind: input, shape index: {}]
  %s9 = inlined_call_operand.hbm [shape: f32[32,256], index: 9, kind: input, shape index: {}]
  %s10 = inlined_call_operand.vmem [shape: f32[1,256], index: 10, kind: input, shape index: {}]
  %s11 = inlined_call_operand.vmem [shape: f32[1,256], index: 11, kind: input, shape index: {}]
  %s12 = inlined_call_operand.hbm [shape: f32[256,128], index: 12, kind: input, shape index: {}]
  %s13 = inlined_call_operand.vmem [shape: f32[1,128], index: 13, kind: input, shape index: {}]
  %s14 = inlined_call_operand.vmem [shape: f32[1,128], index: 14, kind: input, shape index: {}]
  %s15 = inlined_call_operand.vmem [shape: f32[1,128], index: 15, kind: input, shape index: {}]
  %s16 = inlined_call_operand.hbm [shape: f32[2,16], index: 16, kind: output, shape index: {}]
  %s17 = sld [smem:[#allocation0]]
  $region102: #{tpu_custom_call.1} parent=0
    _
  %s19 = ssub.s32 1, %s17
  %s20 = scalar_select 0, %s19, %s17
  $region1: #{tpu_custom_call.1} parent=0
    #allocation2 [shape = 'u8[16384]{0}', space=vmem, size = 0x4000, scoped, tag = 'input window, operand 0, single buffered']
    #allocation3 [shape = 's32[1]{0}', space=sflag, size = 0x4, scoped, tag = 'scoped memory for tpu_custom_call.1']
    #allocation4 [shape = 's32[1]{0}', space=sflag, size = 0x4, scoped, tag = 'scoped memory for tpu_custom_call.1']
    #allocation5 [shape = 'u8[16384]{0}', space=vmem, size = 0x4000, scoped, tag = 'input window, operand 1, single buffered']
    #allocation6 [shape = 's32[1]{0}', space=sflag, size = 0x4, scoped, tag = 'scoped memory for tpu_custom_call.1']
    #allocation7 [shape = 'u8[16384]{0}', space=vmem, size = 0x4000, scoped, tag = 'input window, operand 2, single buffered']
    #allocation8 [shape = 'u8[16384]{0}', space=vmem, size = 0x4000, scoped, tag = 'input window, operand 5, single buffered']
    #allocation9 [shape = 's32[1]{0}', space=sflag, size = 0x4, scoped, tag = 'scoped memory for tpu_custom_call.1']
    #allocation10 [shape = 'u8[32768]{0}', space=vmem, size = 0x8000, scoped, tag = 'input window, operand 8, single buffered']
    #allocation11 [shape = 'u8[32768]{0}', space=vmem, size = 0x8000, scoped, tag = 'input window, operand 9, single buffered']
    #allocation12 [shape = 's32[1]{0}', space=sflag, size = 0x4, scoped, tag = 'scoped memory for tpu_custom_call.1']
    #allocation13 [shape = 'u8[131072]{0}', space=vmem, size = 0x20000, scoped, tag = 'input window, operand 12, single buffered']
    #allocation14 [shape = 'u8[1024]{0}', space=vmem, size = 0x400, scoped, tag = 'output window, operand 0, single buffered']
    %21 = vsyncpa [#allocation3], 0
    %22 = vsyncpa [#allocation6], 0
    %23 = vsyncpa [#allocation9], 0
    %24 = vsyncpa [#allocation12], 0
    %25 = vsyncpa [#allocation4], 0
    // Predicated region
    $region2: #{tpu_custom_call.1} parent=1 // pred_check
      _
    $region3: #{tpu_custom_call.1} parent=1 // pred_check_branch
      %27 = sbr.rel (0) target = $region5
    $region4: #{tpu_custom_call.1} parent=1 // pred_region
      %s29 = ssub.s32 512, 512
      %30 = vsyncadd [#allocation3], %s29
      %s31 = sshll.u32 [#allocation2], 4
      %s32 = int_to_ptr.vmem [resolvable:$true] %s31
      %37 = dma.hbm_to_vmem [thread:$0]  %s0, 512, %s32, [#allocation3], 128, 128, 8
    $region5: #{tpu_custom_call.1} parent=1 // pred_fallthru
      _
    // Predicated region
    $region6: #{tpu_custom_call.1} parent=1 // pred_check
      _
    $region7: #{tpu_custom_call.1} parent=1 // pred_check_branch
      %39 = sbr.rel (0) target = $region9
    $region8: #{tpu_custom_call.1} parent=1 // pred_region
      %s41 = ssub.s32 512, 512
      %42 = vsyncadd [#allocation6], %s41
      %s43 = sshll.u32 [#allocation5], 4
      %s44 = int_to_ptr.vmem [resolvable:$true] %s43
      %49 = dma.hbm_to_vmem [thread:$0]  %s1, 512, %s44, [#allocation6], 128, 128, 8
    $region9: #{tpu_custom_call.1} parent=1 // pred_fallthru
      _
    // Predicated region
    $region10: #{tpu_custom_call.1} parent=1 // pred_check
      _
    $region11: #{tpu_custom_call.1} parent=1 // pred_check_branch
      %51 = sbr.rel (0) target = $region13
    $region12: #{tpu_custom_call.1} parent=1 // pred_region
      %s53 = ssub.s32 512, 512
      %54 = vsyncadd [#allocation6], %s53
      %s55 = sshll.u32 [#allocation7], 4
      %s56 = int_to_ptr.vmem [resolvable:$true] %s55
      %61 = dma.hbm_to_vmem [thread:$0]  %s2, 512, %s56, [#allocation6], 128, 128, 8
    $region13: #{tpu_custom_call.1} parent=1 // pred_fallthru
      _
    // Predicated region
    $region14: #{tpu_custom_call.1} parent=1 // pred_check
      _
    $region15: #{tpu_custom_call.1} parent=1 // pred_check_branch
      %63 = sbr.rel (0) target = $region17
    $region16: #{tpu_custom_call.1} parent=1 // pred_region
      _
    $region17: #{tpu_custom_call.1} parent=1 // pred_fallthru
      _
    // Predicated region
    $region18: #{tpu_custom_call.1} parent=1 // pred_check
      _
    $region19: #{tpu_custom_call.1} parent=1 // pred_check_branch
      %65 = sbr.rel (0) target = $region21
    $region20: #{tpu_custom_call.1} parent=1 // pred_region
      _
    $region21: #{tpu_custom_call.1} parent=1 // pred_fallthru
      _
    // Predicated region
    $region22: #{tpu_custom_call.1} parent=1 // pred_check
      _
    $region23: #{tpu_custom_call.1} parent=1 // pred_check_branch
      %67 = sbr.rel (0) target = $region25
    $region24: #{tpu_custom_call.1} parent=1 // pred_region
      %s69 = ssub.s32 512, 512
      %70 = vsyncadd [#allocation9], %s69
      %s71 = sshll.u32 [#allocation8], 4
      %s72 = int_to_ptr.vmem [resolvable:$true] %s71
      %77 = dma.hbm_to_vmem [thread:$0]  %s5, 512, %s72, [#allocation9], 128, 128, 8
    $region25: #{tpu_custom_call.1} parent=1 // pred_fallthru
      _
    // Predicated region
    $region26: #{tpu_custom_call.1} parent=1 // pred_check
      _
    $region27: #{tpu_custom_call.1} parent=1 // pred_check_branch
      %79 = sbr.rel (0) target = $region29
    $region28: #{tpu_custom_call.1} parent=1 // pred_region
      _
    $region29: #{tpu_custom_call.1} parent=1 // pred_fallthru
      _
    // Predicated region
    $region30: #{tpu_custom_call.1} parent=1 // pred_check
      _
    $region31: #{tpu_custom_call.1} parent=1 // pred_check_branch
      %81 = sbr.rel (0) target = $region33
    $region32: #{tpu_custom_call.1} parent=1 // pred_region
      _
    $region33: #{tpu_custom_call.1} parent=1 // pred_fallthru
      _
    // Predicated region
    $region34: #{tpu_custom_call.1} parent=1 // pred_check
      _
    $region35: #{tpu_custom_call.1} parent=1 // pred_check_branch
      %83 = sbr.rel (0) target = $region37
    $region36: #{tpu_custom_call.1} parent=1 // pred_region
      %s85 = ssub.s32 1024, 1024
      %86 = vsyncadd [#allocation9], %s85
      %s87 = sshll.u32 [#allocation10], 4
      %s88 = int_to_ptr.vmem [resolvable:$true] %s87
      %93 = dma.hbm_to_vmem [thread:$0]  %s8, 1024, %s88, [#allocation9], 256, 256, 16
    $region37: #{tpu_custom_call.1} parent=1 // pred_fallthru
      _
    // Predicated region
    $region38: #{tpu_custom_call.1} parent=1 // pred_check
      _
    $region39: #{tpu_custom_call.1} parent=1 // pred_check_branch
      %95 = sbr.rel (0) target = $region41
    $region40: #{tpu_custom_call.1} parent=1 // pred_region
      %s97 = ssub.s32 1024, 1024
      %98 = vsyncadd [#allocation12], %s97
      %s99 = sshll.u32 [#allocation11], 4
      %s100 = int_to_ptr.vmem [resolvable:$true] %s99
      %105 = dma.hbm_to_vmem [thread:$0]  %s9, 1024, %s100, [#allocation12], 256, 256, 16
    $region41: #{tpu_custom_call.1} parent=1 // pred_fallthru
      _
    // Predicated region
    $region42: #{tpu_custom_call.1} parent=1 // pred_check
      _
    $region43: #{tpu_custom_call.1} parent=1 // pred_check_branch
      %107 = sbr.rel (0) target = $region45
    $region44: #{tpu_custom_call.1} parent=1 // pred_region
      _
    $region45: #{tpu_custom_call.1} parent=1 // pred_fallthru
      _
    // Predicated region
    $region46: #{tpu_custom_call.1} parent=1 // pred_check
      _
    $region47: #{tpu_custom_call.1} parent=1 // pred_check_branch
      %109 = sbr.rel (0) target = $region49
    $region48: #{tpu_custom_call.1} parent=1 // pred_region
      _
    $region49: #{tpu_custom_call.1} parent=1 // pred_fallthru
      _
    // Predicated region
    $region50: #{tpu_custom_call.1} parent=1 // pred_check
      _
    $region51: #{tpu_custom_call.1} parent=1 // pred_check_branch
      %111 = sbr.rel (0) target = $region53
    $region52: #{tpu_custom_call.1} parent=1 // pred_region
      %s113 = ssub.s32 4096, 4096
      %114 = vsyncadd [#allocation12], %s113
      %s115 = sshll.u32 [#allocation13], 4
      %s116 = int_to_ptr.vmem [resolvable:$true] %s115
      %121 = dma.hbm_to_vmem [thread:$0]  %s12, 4096, %s116, [#allocation12], 128, 128, 8
    $region53: #{tpu_custom_call.1} parent=1 // pred_fallthru
      _
    // Predicated region
    $region54: #{tpu_custom_call.1} parent=1 // pred_check
      _
    $region55: #{tpu_custom_call.1} parent=1 // pred_check_branch
      %123 = sbr.rel (0) target = $region57
    $region56: #{tpu_custom_call.1} parent=1 // pred_region
      _
    $region57: #{tpu_custom_call.1} parent=1 // pred_fallthru
      _
    // Predicated region
    $region58: #{tpu_custom_call.1} parent=1 // pred_check
      _
    $region59: #{tpu_custom_call.1} parent=1 // pred_check_branch
      %125 = sbr.rel (0) target = $region61
    $region60: #{tpu_custom_call.1} parent=1 // pred_region
      _
    $region61: #{tpu_custom_call.1} parent=1 // pred_fallthru
      _
    // Predicated region
    $region62: #{tpu_custom_call.1} parent=1 // pred_check
      _
    $region63: #{tpu_custom_call.1} parent=1 // pred_check_branch
      %127 = sbr.rel (0) target = $region65
    $region64: #{tpu_custom_call.1} parent=1 // pred_region
      _
    $region65: #{tpu_custom_call.1} parent=1 // pred_fallthru
      _
    // Predicated region
    $region66: #{tpu_custom_call.1} parent=1 // pred_check
      _
    $region67: #{tpu_custom_call.1} parent=1 // pred_check_branch
      %129 = sbr.rel (0) target = $region69
    $region68: #{tpu_custom_call.1} parent=1 // pred_region
      %130 = dma.done [#allocation3], 512
    $region69: #{tpu_custom_call.1} parent=1 // pred_fallthru
      _
    // Predicated region
    $region70: #{tpu_custom_call.1} parent=1 // pred_check
      _
    $region71: #{tpu_custom_call.1} parent=1 // pred_check_branch
      %132 = sbr.rel (0) target = $region73
    $region72: #{tpu_custom_call.1} parent=1 // pred_region
      %133 = dma.done [#allocation6], 512
    $region73: #{tpu_custom_call.1} parent=1 // pred_fallthru
      _
    // Predicated region
    $region74: #{tpu_custom_call.1} parent=1 // pred_check
      _
    $region75: #{tpu_custom_call.1} parent=1 // pred_check_branch
      %135 = sbr.rel (0) target = $region77
    $region76: #{tpu_custom_call.1} parent=1 // pred_region
      %136 = dma.done [#allocation6], 512
    $region77: #{tpu_custom_call.1} parent=1 // pred_fallthru
      _
    // Predicated region
    $region78: #{tpu_custom_call.1} parent=1 // pred_check
      _
    $region79: #{tpu_custom_call.1} parent=1 // pred_check_branch
      %138 = sbr.rel (0) target = $region81
    $region80: #{tpu_custom_call.1} parent=1 // pred_region
      %139 = dma.done [#allocation9], 512
    $region81: #{tpu_custom_call.1} parent=1 // pred_fallthru
      _
    // Predicated region
    $region82: #{tpu_custom_call.1} parent=1 // pred_check
      _
    $region83: #{tpu_custom_call.1} parent=1 // pred_check_branch
      %141 = sbr.rel (0) target = $region85
    $region84: #{tpu_custom_call.1} parent=1 // pred_region
      %142 = dma.done [#allocation9], 1024
    $region85: #{tpu_custom_call.1} parent=1 // pred_fallthru
      _
    // Predicated region
    $region86: #{tpu_custom_call.1} parent=1 // pred_check
      _
    $region87: #{tpu_custom_call.1} parent=1 // pred_check_branch
      %144 = sbr.rel (0) target = $region89
    $region88: #{tpu_custom_call.1} parent=1 // pred_region
      %145 = dma.done [#allocation12], 1024
    $region89: #{tpu_custom_call.1} parent=1 // pred_fallthru
      _
    // Predicated region
    $region90: #{tpu_custom_call.1} parent=1 // pred_check
      _
    $region91: #{tpu_custom_call.1} parent=1 // pred_check_branch
      %147 = sbr.rel (0) target = $region93
    $region92: #{tpu_custom_call.1} parent=1 // pred_region
      %148 = dma.done [#allocation12], 4096
    $region93: #{tpu_custom_call.1} parent=1 // pred_fallthru
      _
    %v149 = vld [vmem:[#allocation5] sm:$0xff]
    %v150 = vld [vmem:[#allocation5 + $0x8] sm:$0xff]
    %v151 = vld [vmem:[#allocation5 + $0x10] sm:$0xff]
    %v152 = vld [vmem:[#allocation5 + $0x18] sm:$0xff]
    %v153 = vld [vmem:[#allocation7] sm:$0xff]
    %v154 = vld [vmem:[#allocation7 + $0x8] sm:$0xff]
    %v155 = vld [vmem:[#allocation7 + $0x10] sm:$0xff]
    %v156 = vld [vmem:[#allocation7 + $0x18] sm:$0xff]
    %vm157 = vcmask 261120
    %v159 = vsel %vm157, %v149, 0
    %v162 = vsel %vm157, %v150, 0
    %v165 = vsel %vm157, %v151, 0
    %v168 = vsel %vm157, %v152, 0
    %170 = vmatprep.subr.mxu0 0.0
    %171 = vmatpush1.msra.mxu0 0.0
    %172 = vmatprep.subr.mxu0 0.0
    %173 = vmatpush1.msra.mxu0 0.0
    %174 = vmatprep.subr.mxu0 0.0
    %175 = vmatpush1.msra.mxu0 0.0
    %176 = vmatprep.subr.mxu0 0.0
    %177 = vmatpush1.msra.mxu0 0.0
    %178 = vmatprep.subr.mxu0 0.0
    %179 = vmatpush1.msra.mxu0 0.0
    %180 = vmatprep.subr.mxu0 0.0
    %181 = vmatpush1.msra.mxu0 0.0
    %182 = vmatprep.subr.mxu0 0.0
    %183 = vmatpush1.msra.mxu0 0.0
    %184 = vmatprep.subr.mxu0 0.0
    %185 = vmatpush1.msra.mxu0 0.0
    %186 = vmatprep.subr.mxu0 0.0
    %187 = vmatpush1.msra.mxu0 0.0
    %188 = vmatprep.subr.mxu0 0.0
    %189 = vmatpush1.msra.mxu0 0.0
    %190 = vmatprep.subr.mxu0 0.0
    %191 = vmatpush1.msra.mxu0 0.0
    %192 = vmatprep.subr.mxu0 0.0
    %193 = vmatpush1.msra.mxu0 0.0
    %194 = vmatprep.subr.mxu0 0.0
    %195 = vmatpush1.msra.mxu0 %v156
    %196 = vmatprep.subr.mxu0 0.0
    %197 = vmatpush1.msra.mxu0 %v155
    %198 = vmatprep.subr.mxu0 0.0
    %199 = vmatpush1.msra.mxu0 %v154
    %200 = vmatprep.subr.mxu0 0.0
    %201 = vmatpush1.msra.mxu0 %v153
    %202 = vmatprep.subr.mxu0 0.0
    %203 = vmatpush2.msra.mxu0 0.0
    %204 = vmatprep.subr.mxu0 0.0
    %205 = vmatpush2.msra.mxu0 0.0
    %206 = vmatprep.subr.mxu0 0.0
    %207 = vmatpush2.msra.mxu0 0.0
    %208 = vmatprep.subr.mxu0 0.0
    %209 = vmatpush2.msra.mxu0 0.0
    %210 = vmatprep.subr.mxu0 0.0
    %211 = vmatpush2.msra.mxu0 0.0
    %212 = vmatprep.subr.mxu0 0.0
    %213 = vmatpush2.msra.mxu0 0.0
    %214 = vmatprep.subr.mxu0 0.0
    %215 = vmatpush2.msra.mxu0 0.0
    %216 = vmatprep.subr.mxu0 0.0
    %217 = vmatpush2.msra.mxu0 0.0
    %218 = vmatprep.subr.mxu0 0.0
    %219 = vmatpush2.msra.mxu0 0.0
    %220 = vmatprep.subr.mxu0 0.0
    %221 = vmatpush2.msra.mxu0 0.0
    %222 = vmatprep.subr.mxu0 0.0
    %223 = vmatpush2.msra.mxu0 0.0
    %224 = vmatprep.subr.mxu0 0.0
    %225 = vmatpush2.msra.mxu0 0.0
    %226 = vmatprep.subr.mxu0 0.0
    %227 = vmatpush2.msra.mxu0 0.0
    %228 = vmatprep.subr.mxu0 0.0
    %229 = vmatpush2.msra.mxu0 0.0
    %230 = vmatprep.subr.mxu0 0.0
    %231 = vmatpush2.msra.mxu0 0.0
    %232 = vmatprep.subr.mxu0 0.0
    %233 = vmatpush2.msra.mxu0 0.0
    %234 = vmatprep.mubr.f32.mxu0 0.0
    %235 = vmatmul.mubr.f32.gmra.mxu0 %v159
    %v236 = vpop.f32.mrf.mxu0
    %v237 = vadd.f32 0.0, %v236
    %v238 = vpop.f32.mrf.mxu0
    %239 = vmatprep.mubr.f32.mxu0 0.0
    %240 = vmatmul.mubr.f32.gmra.mxu0 %v162
    %v241 = vpop.f32.mrf.mxu0
    %v242 = vadd.f32 0.0, %v241
    %v243 = vpop.f32.mrf.mxu0
    %244 = vmatprep.mubr.f32.mxu0 0.0
    %245 = vmatmul.mubr.f32.gmra.mxu0 %v165
    %v246 = vpop.f32.mrf.mxu0
    %v247 = vadd.f32 0.0, %v246
    %v248 = vpop.f32.mrf.mxu0
    %249 = vmatprep.mubr.f32.mxu0 0.0
    %250 = vmatmul.mubr.f32.gmra.mxu0 %v168
    %v251 = vpop.f32.mrf.mxu0
    %v252 = vadd.f32 0.0, %v251
    %v253 = vpop.f32.mrf.mxu0
    %254 = vdwg.mxu0
    %v255 = vld [vmem:[%s3] sm:$0x1]
    %v257 = vlaneseq
    %v258 = vshrl.u32 %v257, 7
    %v259 = vsub.s32 0, %v258
    %v260 = vrot.slane %v255, %v259
    %v262 = vmul.f32 %v237, %v260
    %v263 = vmul.f32 %v242, %v260
    %v264 = vmul.f32 %v247, %v260
    %v265 = vmul.f32 %v252, %v260
    %v266 = vld [vmem:[%s4] sm:$0x1]
    %v268 = vlaneseq
    %v269 = vshrl.u32 %v268, 7
    %v270 = vsub.s32 0, %v269
    %v271 = vrot.slane %v266, %v270
    %v273 = vadd.f32 %v262, %v271
    %v274 = vadd.f32 %v263, %v271
    %v275 = vadd.f32 %v264, %v271
    %v276 = vadd.f32 %v265, %v271
    %v277 = vmax.f32 %v273, 0.0
    %v278 = vmax.f32 %v274, 0.0
    %v279 = vmax.f32 %v275, 0.0
    %v280 = vmax.f32 %v276, 0.0
    %v281 = vld [vmem:[#allocation8] sm:$0xff]
    %v282 = vld [vmem:[#allocation8 + $0x8] sm:$0xff]
    %v283 = vld [vmem:[#allocation8 + $0x10] sm:$0xff]
    %v284 = vld [vmem:[#allocation8 + $0x18] sm:$0xff]
    %v286 = vsel %vm157, %v277, 0
    %v289 = vsel %vm157, %v278, 0
    %v292 = vsel %vm157, %v279, 0
    %v295 = vsel %vm157, %v280, 0
    %297 = vmatprep.subr.mxu0 0.0
    %298 = vmatpush1.msra.mxu0 0.0
    %299 = vmatprep.subr.mxu0 0.0
    %300 = vmatpush1.msra.mxu0 0.0
    %301 = vmatprep.subr.mxu0 0.0
    %302 = vmatpush1.msra.mxu0 0.0
    %303 = vmatprep.subr.mxu0 0.0
    %304 = vmatpush1.msra.mxu0 0.0
    %305 = vmatprep.subr.mxu0 0.0
    %306 = vmatpush1.msra.mxu0 0.0
    %307 = vmatprep.subr.mxu0 0.0
    %308 = vmatpush1.msra.mxu0 0.0
    %309 = vmatprep.subr.mxu0 0.0
    %310 = vmatpush1.msra.mxu0 0.0
    %311 = vmatprep.subr.mxu0 0.0
    %312 = vmatpush1.msra.mxu0 0.0
    %313 = vmatprep.subr.mxu0 0.0
    %314 = vmatpush1.msra.mxu0 0.0
    %315 = vmatprep.subr.mxu0 0.0
    %316 = vmatpush1.msra.mxu0 0.0
    %317 = vmatprep.subr.mxu0 0.0
    %318 = vmatpush1.msra.mxu0 0.0
    %319 = vmatprep.subr.mxu0 0.0
    %320 = vmatpush1.msra.mxu0 0.0
    %321 = vmatprep.subr.mxu0 0.0
    %322 = vmatpush1.msra.mxu0 %v284
    %323 = vmatprep.subr.mxu0 0.0
    %324 = vmatpush1.msra.mxu0 %v283
    %325 = vmatprep.subr.mxu0 0.0
    %326 = vmatpush1.msra.mxu0 %v282
    %327 = vmatprep.subr.mxu0 0.0
    %328 = vmatpush1.msra.mxu0 %v281
    %329 = vmatprep.subr.mxu0 0.0
    %330 = vmatpush2.msra.mxu0 0.0
    %331 = vmatprep.subr.mxu0 0.0
    %332 = vmatpush2.msra.mxu0 0.0
    %333 = vmatprep.subr.mxu0 0.0
    %334 = vmatpush2.msra.mxu0 0.0
    %335 = vmatprep.subr.mxu0 0.0
    %336 = vmatpush2.msra.mxu0 0.0
    %337 = vmatprep.subr.mxu0 0.0
    %338 = vmatpush2.msra.mxu0 0.0
    %339 = vmatprep.subr.mxu0 0.0
    %340 = vmatpush2.msra.mxu0 0.0
    %341 = vmatprep.subr.mxu0 0.0
    %342 = vmatpush2.msra.mxu0 0.0
    %343 = vmatprep.subr.mxu0 0.0
    %344 = vmatpush2.msra.mxu0 0.0
    %345 = vmatprep.subr.mxu0 0.0
    %346 = vmatpush2.msra.mxu0 0.0
    %347 = vmatprep.subr.mxu0 0.0
    %348 = vmatpush2.msra.mxu0 0.0
    %349 = vmatprep.subr.mxu0 0.0
    %350 = vmatpush2.msra.mxu0 0.0
    %351 = vmatprep.subr.mxu0 0.0
    %352 = vmatpush2.msra.mxu0 0.0
    %353 = vmatprep.subr.mxu0 0.0
    %354 = vmatpush2.msra.mxu0 0.0
    %355 = vmatprep.subr.mxu0 0.0
    %356 = vmatpush2.msra.mxu0 0.0
    %357 = vmatprep.subr.mxu0 0.0
    %358 = vmatpush2.msra.mxu0 0.0
    %359 = vmatprep.subr.mxu0 0.0
    %360 = vmatpush2.msra.mxu0 0.0
    %361 = vmatprep.mubr.f32.mxu0 0.0
    %362 = vmatmul.mubr.f32.gmra.mxu0 %v286
    %v363 = vpop.f32.mrf.mxu0
    %v364 = vadd.f32 0.0, %v363
    %v365 = vpop.f32.mrf.mxu0
    %366 = vmatprep.mubr.f32.mxu0 0.0
    %367 = vmatmul.mubr.f32.gmra.mxu0 %v289
    %v368 = vpop.f32.mrf.mxu0
    %v369 = vadd.f32 0.0, %v368
    %v370 = vpop.f32.mrf.mxu0
    %371 = vmatprep.mubr.f32.mxu0 0.0
    %372 = vmatmul.mubr.f32.gmra.mxu0 %v292
    %v373 = vpop.f32.mrf.mxu0
    %v374 = vadd.f32 0.0, %v373
    %v375 = vpop.f32.mrf.mxu0
    %376 = vmatprep.mubr.f32.mxu0 0.0
    %377 = vmatmul.mubr.f32.gmra.mxu0 %v295
    %v378 = vpop.f32.mrf.mxu0
    %v379 = vadd.f32 0.0, %v378
    %v380 = vpop.f32.mrf.mxu0
    %381 = vdwg.mxu0
    %v382 = vld [vmem:[%s6] sm:$0x1]
    %v384 = vlaneseq
    %v385 = vshrl.u32 %v384, 7
    %v386 = vsub.s32 0, %v385
    %v387 = vrot.slane %v382, %v386
    %v389 = vmul.f32 %v364, %v387
    %v390 = vmul.f32 %v369, %v387
    %v391 = vmul.f32 %v374, %v387
    %v392 = vmul.f32 %v379, %v387
    %v393 = vld [vmem:[%s7] sm:$0x1]
    %v395 = vlaneseq
    %v396 = vshrl.u32 %v395, 7
    %v397 = vsub.s32 0, %v396
    %v398 = vrot.slane %v393, %v397
    %v400 = vadd.f32 %v389, %v398
    %v401 = vadd.f32 %v390, %v398
    %v402 = vadd.f32 %v391, %v398
    %v403 = vadd.f32 %v392, %v398
    %v404 = vmax.f32 %v400, 0.0
    %v405 = vmax.f32 %v401, 0.0
    %v406 = vmax.f32 %v402, 0.0
    %v407 = vmax.f32 %v403, 0.0
    %v408 = vsel %vm157, %v404, -inf
    %v409 = vsel %vm157, %v405, -inf
    %v410 = vmax.f32 %v408, %v409
    %v411 = vrot.slane %v410, 4
    %v412 = vmax.f32 %v410, %v411
    %v413 = vrot.slane %v412, 2
    %v414 = vmax.f32 %v412, %v413
    %v415 = vrot.slane %v414, 1
    %v416 = vmax.f32 %v414, %v415
    %v417 = vsel %vm157, %v406, -inf
    %v418 = vsel %vm157, %v407, -inf
    %v419 = vmax.f32 %v417, %v418
    %v420 = vrot.slane %v419, 4
    %v421 = vmax.f32 %v419, %v420
    %v422 = vrot.slane %v421, 2
    %v423 = vmax.f32 %v421, %v422
    %v424 = vrot.slane %v423, 1
    %v425 = vmax.f32 %v423, %v424
    %v426 = vld [vmem:[#allocation11] sm:$0xff]
    %v427 = vld [vmem:[#allocation11 + $0x8] sm:$0xff]
    %v428 = vld [vmem:[#allocation11 + $0x10] sm:$0xff]
    %v429 = vld [vmem:[#allocation11 + $0x18] sm:$0xff]
    %v430 = vld [vmem:[#allocation11 + $0x20] sm:$0xff]
    %v431 = vld [vmem:[#allocation11 + $0x28] sm:$0xff]
    %v432 = vld [vmem:[#allocation11 + $0x30] sm:$0xff]
    %v433 = vld [vmem:[#allocation11 + $0x38] sm:$0xff]
    %vm436 = vcmask 1041409
    %v437 = vsel %vm436, %v425, %v416
    %v438 = vsel %vm157, %v437, 0
    %440 = vmatprep.subr.mxu0 0.0
    %441 = vmatpush1.msra.mxu0 0.0
    %442 = vmatprep.subr.mxu0 0.0
    %443 = vmatpush1.msra.mxu0 0.0
    %444 = vmatprep.subr.mxu0 0.0
    %445 = vmatpush1.msra.mxu0 0.0
    %446 = vmatprep.subr.mxu0 0.0
    %447 = vmatpush1.msra.mxu0 0.0
    %448 = vmatprep.subr.mxu0 0.0
    %449 = vmatpush1.msra.mxu0 0.0
    %450 = vmatprep.subr.mxu0 0.0
    %451 = vmatpush1.msra.mxu0 0.0
    %452 = vmatprep.subr.mxu0 0.0
    %453 = vmatpush1.msra.mxu0 0.0
    %454 = vmatprep.subr.mxu0 0.0
    %455 = vmatpush1.msra.mxu0 0.0
    %456 = vmatprep.subr.mxu0 0.0
    %457 = vmatpush1.msra.mxu0 0.0
    %458 = vmatprep.subr.mxu0 0.0
    %459 = vmatpush1.msra.mxu0 0.0
    %460 = vmatprep.subr.mxu0 0.0
    %461 = vmatpush1.msra.mxu0 0.0
    %462 = vmatprep.subr.mxu0 0.0
    %463 = vmatpush1.msra.mxu0 0.0
    %464 = vmatprep.subr.mxu0 %v433
    %465 = vmatpush1.msra.mxu0 %v432
    %466 = vmatprep.subr.mxu0 %v431
    %467 = vmatpush1.msra.mxu0 %v430
    %468 = vmatprep.subr.mxu0 %v429
    %469 = vmatpush1.msra.mxu0 %v428
    %470 = vmatprep.subr.mxu0 %v427
    %471 = vmatpush1.msra.mxu0 %v426
    %472 = vmatprep.subr.mxu0 0.0
    %473 = vmatpush2.msra.mxu0 0.0
    %474 = vmatprep.subr.mxu0 0.0
    %475 = vmatpush2.msra.mxu0 0.0
    %476 = vmatprep.subr.mxu0 0.0
    %477 = vmatpush2.msra.mxu0 0.0
    %478 = vmatprep.subr.mxu0 0.0
    %479 = vmatpush2.msra.mxu0 0.0
    %480 = vmatprep.subr.mxu0 0.0
    %481 = vmatpush2.msra.mxu0 0.0
    %482 = vmatprep.subr.mxu0 0.0
    %483 = vmatpush2.msra.mxu0 0.0
    %484 = vmatprep.subr.mxu0 0.0
    %485 = vmatpush2.msra.mxu0 0.0
    %486 = vmatprep.subr.mxu0 0.0
    %487 = vmatpush2.msra.mxu0 0.0
    %488 = vmatprep.subr.mxu0 0.0
    %489 = vmatpush2.msra.mxu0 0.0
    %490 = vmatprep.subr.mxu0 0.0
    %491 = vmatpush2.msra.mxu0 0.0
    %492 = vmatprep.subr.mxu0 0.0
    %493 = vmatpush2.msra.mxu0 0.0
    %494 = vmatprep.subr.mxu0 0.0
    %495 = vmatpush2.msra.mxu0 0.0
    %496 = vmatprep.subr.mxu0 0.0
    %497 = vmatpush2.msra.mxu0 0.0
    %498 = vmatprep.subr.mxu0 0.0
    %499 = vmatpush2.msra.mxu0 0.0
    %500 = vmatprep.subr.mxu0 0.0
    %501 = vmatpush2.msra.mxu0 0.0
    %502 = vmatprep.subr.mxu0 0.0
    %503 = vmatpush2.msra.mxu0 0.0
    %504 = vmatprep.mubr.f32.mxu0 0.0
    %505 = vmatmul.mubr.f32.gmra.mxu0 %v438
    %v506 = vpop.f32.mrf.mxu0
    %v507 = vadd.f32 0.0, %v506
    %v508 = vpop.f32.mrf.mxu0
    %v509 = vadd.f32 0.0, %v508
    %510 = vdwg.mxu0
    %v511 = vld [vmem:[#allocation2] sm:$0xff]
    %v512 = vld [vmem:[#allocation2 + $0x8] sm:$0xff]
    %v513 = vld [vmem:[#allocation2 + $0x10] sm:$0xff]
    %v514 = vld [vmem:[#allocation2 + $0x18] sm:$0xff]
    %v515 = vld [vmem:[#allocation10] sm:$0xff]
    %v516 = vld [vmem:[#allocation10 + $0x8] sm:$0xff]
    %v517 = vld [vmem:[#allocation10 + $0x10] sm:$0xff]
    %v518 = vld [vmem:[#allocation10 + $0x18] sm:$0xff]
    %v519 = vld [vmem:[#allocation10 + $0x20] sm:$0xff]
    %v520 = vld [vmem:[#allocation10 + $0x28] sm:$0xff]
    %v521 = vld [vmem:[#allocation10 + $0x30] sm:$0xff]
    %v522 = vld [vmem:[#allocation10 + $0x38] sm:$0xff]
    %v524 = vsel %vm157, %v511, 0
    %v527 = vsel %vm157, %v512, 0
    %v530 = vsel %vm157, %v513, 0
    %v533 = vsel %vm157, %v514, 0
    %535 = vmatprep.subr.mxu0 0.0
    %536 = vmatpush1.msra.mxu0 0.0
    %537 = vmatprep.subr.mxu0 0.0
    %538 = vmatpush1.msra.mxu0 0.0
    %539 = vmatprep.subr.mxu0 0.0
    %540 = vmatpush1.msra.mxu0 0.0
    %541 = vmatprep.subr.mxu0 0.0
    %542 = vmatpush1.msra.mxu0 0.0
    %543 = vmatprep.subr.mxu0 0.0
    %544 = vmatpush1.msra.mxu0 0.0
    %545 = vmatprep.subr.mxu0 0.0
    %546 = vmatpush1.msra.mxu0 0.0
    %547 = vmatprep.subr.mxu0 0.0
    %548 = vmatpush1.msra.mxu0 0.0
    %549 = vmatprep.subr.mxu0 0.0
    %550 = vmatpush1.msra.mxu0 0.0
    %551 = vmatprep.subr.mxu0 0.0
    %552 = vmatpush1.msra.mxu0 0.0
    %553 = vmatprep.subr.mxu0 0.0
    %554 = vmatpush1.msra.mxu0 0.0
    %555 = vmatprep.subr.mxu0 0.0
    %556 = vmatpush1.msra.mxu0 0.0
    %557 = vmatprep.subr.mxu0 0.0
    %558 = vmatpush1.msra.mxu0 0.0
    %559 = vmatprep.subr.mxu0 %v522
    %560 = vmatpush1.msra.mxu0 %v521
    %561 = vmatprep.subr.mxu0 %v520
    %562 = vmatpush1.msra.mxu0 %v519
    %563 = vmatprep.subr.mxu0 %v518
    %564 = vmatpush1.msra.mxu0 %v517
    %565 = vmatprep.subr.mxu0 %v516
    %566 = vmatpush1.msra.mxu0 %v515
    %567 = vmatprep.subr.mxu0 0.0
    %568 = vmatpush2.msra.mxu0 0.0
    %569 = vmatprep.subr.mxu0 0.0
    %570 = vmatpush2.msra.mxu0 0.0
    %571 = vmatprep.subr.mxu0 0.0
    %572 = vmatpush2.msra.mxu0 0.0
    %573 = vmatprep.subr.mxu0 0.0
    %574 = vmatpush2.msra.mxu0 0.0
    %575 = vmatprep.subr.mxu0 0.0
    %576 = vmatpush2.msra.mxu0 0.0
    %577 = vmatprep.subr.mxu0 0.0
    %578 = vmatpush2.msra.mxu0 0.0
    %579 = vmatprep.subr.mxu0 0.0
    %580 = vmatpush2.msra.mxu0 0.0
    %581 = vmatprep.subr.mxu0 0.0
    %582 = vmatpush2.msra.mxu0 0.0
    %583 = vmatprep.subr.mxu0 0.0
    %584 = vmatpush2.msra.mxu0 0.0
    %585 = vmatprep.subr.mxu0 0.0
    %586 = vmatpush2.msra.mxu0 0.0
    %587 = vmatprep.subr.mxu0 0.0
    %588 = vmatpush2.msra.mxu0 0.0
    %589 = vmatprep.subr.mxu0 0.0
    %590 = vmatpush2.msra.mxu0 0.0
    %591 = vmatprep.subr.mxu0 0.0
    %592 = vmatpush2.msra.mxu0 0.0
    %593 = vmatprep.subr.mxu0 0.0
    %594 = vmatpush2.msra.mxu0 0.0
    %595 = vmatprep.subr.mxu0 0.0
    %596 = vmatpush2.msra.mxu0 0.0
    %597 = vmatprep.subr.mxu0 0.0
    %598 = vmatpush2.msra.mxu0 0.0
    %599 = vmatprep.mubr.f32.mxu0 0.0
    %600 = vmatmul.mubr.f32.gmra.mxu0 %v524
    %v601 = vpop.f32.mrf.mxu0
    %v602 = vadd.f32 0.0, %v601
    %v603 = vpop.f32.mrf.mxu0
    %v604 = vadd.f32 0.0, %v603
    %605 = vmatprep.mubr.f32.mxu0 0.0
    %606 = vmatmul.mubr.f32.gmra.mxu0 %v527
    %v607 = vpop.f32.mrf.mxu0
    %v608 = vadd.f32 0.0, %v607
    %v609 = vpop.f32.mrf.mxu0
    %v610 = vadd.f32 0.0, %v609
    %611 = vmatprep.mubr.f32.mxu0 0.0
    %612 = vmatmul.mubr.f32.gmra.mxu0 %v530
    %v613 = vpop.f32.mrf.mxu0
    %v614 = vadd.f32 0.0, %v613
    %v615 = vpop.f32.mrf.mxu0
    %v616 = vadd.f32 0.0, %v615
    %617 = vmatprep.mubr.f32.mxu0 0.0
    %618 = vmatmul.mubr.f32.gmra.mxu0 %v533
    %v619 = vpop.f32.mrf.mxu0
    %v620 = vadd.f32 0.0, %v619
    %v621 = vpop.f32.mrf.mxu0
    %v622 = vadd.f32 0.0, %v621
    %623 = vdwg.mxu0
    %v626 = vcombine.low %v507, %v509
    %v628 = vunpack.c.l.s4 1966171168
    %v629 = vunpack.c.0.s8 %v628
    %v630 = vlaneseq
    %v631 = vshrl.u32 %v630, 7
    %v632 = vsub.s32 %v629, %v631
    %v633 = vrot.slane %v626, %v632
    %v634 = vcombine.high %v633, %v633
    %v636 = vunpack.c.l.s4 1966171168
    %v637 = vunpack.c.0.s8 %v636
    %v638 = vlaneseq
    %v639 = vshrl.u32 %v638, 7
    %v640 = vsub.s32 %v637, %v639
    %v641 = vrot.slane %v633, %v640
    %v643 = vunpack.c.l.s4 1966171168
    %v644 = vunpack.c.0.s8 %v643
    %v645 = vlaneseq
    %v646 = vshrl.u32 %v645, 7
    %v647 = vsub.s32 %v644, %v646
    %v648 = vrot.slane %v634, %v647
    %v649 = vlaneseq
    %v650 = vshrl.u32 %v649, 7
    %v651 = vsub.s32 0, %v650
    %v652 = vrot.slane %v641, %v651
    %v653 = vlaneseq
    %v654 = vshrl.u32 %v653, 7
    %v655 = vsub.s32 1, %v654
    %v656 = vrot.slane %v641, %v655
    %v657 = vlaneseq
    %v658 = vshrl.u32 %v657, 7
    %v659 = vsub.s32 0, %v658
    %v660 = vrot.slane %v648, %v659
    %v661 = vlaneseq
    %v662 = vshrl.u32 %v661, 7
    %v663 = vsub.s32 1, %v662
    %v664 = vrot.slane %v648, %v663
    %v669 = vadd.f32 %v602, %v652
    %v670 = vadd.f32 %v604, %v656
    %v671 = vadd.f32 %v608, %v652
    %v672 = vadd.f32 %v610, %v656
    %v673 = vadd.f32 %v614, %v660
    %v674 = vadd.f32 %v616, %v664
    %v675 = vadd.f32 %v620, %v660
    %v676 = vadd.f32 %v622, %v664
    %v677 = vld [vmem:[%s10] sm:$0x3]
    %v679 = vlaneseq
    %v680 = vshrl.u32 %v679, 7
    %v681 = vsub.s32 0, %v680
    %v682 = vrot.slane %v677, %v681
    %v683 = vlaneseq
    %v684 = vshrl.u32 %v683, 7
    %v685 = vsub.s32 1, %v684
    %v686 = vrot.slane %v677, %v685
    %v689 = vmul.f32 %v669, %v682
    %v690 = vmul.f32 %v670, %v686
    %v691 = vmul.f32 %v671, %v682
    %v692 = vmul.f32 %v672, %v686
    %v693 = vmul.f32 %v673, %v682
    %v694 = vmul.f32 %v674, %v686
    %v695 = vmul.f32 %v675, %v682
    %v696 = vmul.f32 %v676, %v686
    %v697 = vld [vmem:[%s11] sm:$0x3]
    %v699 = vlaneseq
    %v700 = vshrl.u32 %v699, 7
    %v701 = vsub.s32 0, %v700
    %v702 = vrot.slane %v697, %v701
    %v703 = vlaneseq
    %v704 = vshrl.u32 %v703, 7
    %v705 = vsub.s32 1, %v704
    %v706 = vrot.slane %v697, %v705
    %v709 = vadd.f32 %v689, %v702
    %v710 = vadd.f32 %v690, %v706
    %v711 = vadd.f32 %v691, %v702
    %v712 = vadd.f32 %v692, %v706
    %v713 = vadd.f32 %v693, %v702
    %v714 = vadd.f32 %v694, %v706
    %v715 = vadd.f32 %v695, %v702
    %v716 = vadd.f32 %v696, %v706
    %v717 = vmax.f32 %v709, 0.0
    %v718 = vmax.f32 %v710, 0.0
    %v719 = vmax.f32 %v711, 0.0
    %v720 = vmax.f32 %v712, 0.0
    %v721 = vmax.f32 %v713, 0.0
    %v722 = vmax.f32 %v714, 0.0
    %v723 = vmax.f32 %v715, 0.0
    %v724 = vmax.f32 %v716, 0.0
    %v725 = vld [vmem:[#allocation13] sm:$0xff]
    %v726 = vld [vmem:[#allocation13 + $0x8] sm:$0xff]
    %v727 = vld [vmem:[#allocation13 + $0x10] sm:$0xff]
    %v728 = vld [vmem:[#allocation13 + $0x18] sm:$0xff]
    %v729 = vld [vmem:[#allocation13 + $0x20] sm:$0xff]
    %v730 = vld [vmem:[#allocation13 + $0x28] sm:$0xff]
    %v731 = vld [vmem:[#allocation13 + $0x30] sm:$0xff]
    %v732 = vld [vmem:[#allocation13 + $0x38] sm:$0xff]
    %v733 = vld [vmem:[#allocation13 + $0x40] sm:$0xff]
    %v734 = vld [vmem:[#allocation13 + $0x48] sm:$0xff]
    %v735 = vld [vmem:[#allocation13 + $0x50] sm:$0xff]
    %v736 = vld [vmem:[#allocation13 + $0x58] sm:$0xff]
    %v737 = vld [vmem:[#allocation13 + $0x60] sm:$0xff]
    %v738 = vld [vmem:[#allocation13 + $0x68] sm:$0xff]
    %v739 = vld [vmem:[#allocation13 + $0x70] sm:$0xff]
    %v740 = vld [vmem:[#allocation13 + $0x78] sm:$0xff]
    %v741 = vld [vmem:[#allocation13 + $0x80] sm:$0xff]
    %v742 = vld [vmem:[#allocation13 + $0x88] sm:$0xff]
    %v743 = vld [vmem:[#allocation13 + $0x90] sm:$0xff]
    %v744 = vld [vmem:[#allocation13 + $0x98] sm:$0xff]
    %v745 = vld [vmem:[#allocation13 + $0xa0] sm:$0xff]
    %v746 = vld [vmem:[#allocation13 + $0xa8] sm:$0xff]
    %v747 = vld [vmem:[#allocation13 + $0xb0] sm:$0xff]
    %v748 = vld [vmem:[#allocation13 + $0xb8] sm:$0xff]
    %v749 = vld [vmem:[#allocation13 + $0xc0] sm:$0xff]
    %v750 = vld [vmem:[#allocation13 + $0xc8] sm:$0xff]
    %v751 = vld [vmem:[#allocation13 + $0xd0] sm:$0xff]
    %v752 = vld [vmem:[#allocation13 + $0xd8] sm:$0xff]
    %v753 = vld [vmem:[#allocation13 + $0xe0] sm:$0xff]
    %v754 = vld [vmem:[#allocation13 + $0xe8] sm:$0xff]
    %v755 = vld [vmem:[#allocation13 + $0xf0] sm:$0xff]
    %v756 = vld [vmem:[#allocation13 + $0xf8] sm:$0xff]
    %757 = vmatprep.subr.mxu0 0.0
    %758 = vmatpush1.msra.mxu0 %v740
    %759 = vmatprep.subr.mxu0 0.0
    %760 = vmatpush1.msra.mxu0 %v739
    %761 = vmatprep.subr.mxu0 0.0
    %762 = vmatpush1.msra.mxu0 %v738
    %763 = vmatprep.subr.mxu0 0.0
    %764 = vmatpush1.msra.mxu0 %v737
    %765 = vmatprep.subr.mxu0 0.0
    %766 = vmatpush1.msra.mxu0 %v736
    %767 = vmatprep.subr.mxu0 0.0
    %768 = vmatpush1.msra.mxu0 %v735
    %769 = vmatprep.subr.mxu0 0.0
    %770 = vmatpush1.msra.mxu0 %v734
    %771 = vmatprep.subr.mxu0 0.0
    %772 = vmatpush1.msra.mxu0 %v733
    %773 = vmatprep.subr.mxu0 0.0
    %774 = vmatpush1.msra.mxu0 %v732
    %775 = vmatprep.subr.mxu0 0.0
    %776 = vmatpush1.msra.mxu0 %v731
    %777 = vmatprep.subr.mxu0 0.0
    %778 = vmatpush1.msra.mxu0 %v730
    %779 = vmatprep.subr.mxu0 0.0
    %780 = vmatpush1.msra.mxu0 %v729
    %781 = vmatprep.subr.mxu0 0.0
    %782 = vmatpush1.msra.mxu0 %v728
    %783 = vmatprep.subr.mxu0 0.0
    %784 = vmatpush1.msra.mxu0 %v727
    %785 = vmatprep.subr.mxu0 0.0
    %786 = vmatpush1.msra.mxu0 %v726
    %787 = vmatprep.subr.mxu0 0.0
    %788 = vmatpush1.msra.mxu0 %v725
    %789 = vmatprep.subr.mxu0 0.0
    %790 = vmatpush2.msra.mxu0 %v756
    %791 = vmatprep.subr.mxu0 0.0
    %792 = vmatpush2.msra.mxu0 %v755
    %793 = vmatprep.subr.mxu0 0.0
    %794 = vmatpush2.msra.mxu0 %v754
    %795 = vmatprep.subr.mxu0 0.0
    %796 = vmatpush2.msra.mxu0 %v753
    %797 = vmatprep.subr.mxu0 0.0
    %798 = vmatpush2.msra.mxu0 %v752
    %799 = vmatprep.subr.mxu0 0.0
    %800 = vmatpush2.msra.mxu0 %v751
    %801 = vmatprep.subr.mxu0 0.0
    %802 = vmatpush2.msra.mxu0 %v750
    %803 = vmatprep.subr.mxu0 0.0
    %804 = vmatpush2.msra.mxu0 %v749
    %805 = vmatprep.subr.mxu0 0.0
    %806 = vmatpush2.msra.mxu0 %v748
    %807 = vmatprep.subr.mxu0 0.0
    %808 = vmatpush2.msra.mxu0 %v747
    %809 = vmatprep.subr.mxu0 0.0
    %810 = vmatpush2.msra.mxu0 %v746
    %811 = vmatprep.subr.mxu0 0.0
    %812 = vmatpush2.msra.mxu0 %v745
    %813 = vmatprep.subr.mxu0 0.0
    %814 = vmatpush2.msra.mxu0 %v744
    %815 = vmatprep.subr.mxu0 0.0
    %816 = vmatpush2.msra.mxu0 %v743
    %817 = vmatprep.subr.mxu0 0.0
    %818 = vmatpush2.msra.mxu0 %v742
    %819 = vmatprep.subr.mxu0 0.0
    %820 = vmatpush2.msra.mxu0 %v741
    %821 = vmatprep.mubr.f32.mxu0 %v718
    %822 = vmatmul.mubr.f32.gmra.mxu0 %v717
    %v823 = vpop.f32.mrf.mxu0
    %v824 = vadd.f32 0.0, %v823
    %v825 = vpop.f32.mrf.mxu0
    %826 = vmatprep.mubr.f32.mxu0 %v720
    %827 = vmatmul.mubr.f32.gmra.mxu0 %v719
    %v828 = vpop.f32.mrf.mxu0
    %v829 = vadd.f32 0.0, %v828
    %v830 = vpop.f32.mrf.mxu0
    %831 = vmatprep.mubr.f32.mxu0 %v722
    %832 = vmatmul.mubr.f32.gmra.mxu0 %v721
    %v833 = vpop.f32.mrf.mxu0
    %v834 = vadd.f32 0.0, %v833
    %v835 = vpop.f32.mrf.mxu0
    %836 = vmatprep.mubr.f32.mxu0 %v724
    %837 = vmatmul.mubr.f32.gmra.mxu0 %v723
    %v838 = vpop.f32.mrf.mxu0
    %v839 = vadd.f32 0.0, %v838
    %v840 = vpop.f32.mrf.mxu0
    %841 = vdwg.mxu0
    %v842 = vld [vmem:[%s13] sm:$0x1]
    %v844 = vlaneseq
    %v845 = vshrl.u32 %v844, 7
    %v846 = vsub.s32 0, %v845
    %v847 = vrot.slane %v842, %v846
    %v849 = vmul.f32 %v824, %v847
    %v850 = vmul.f32 %v829, %v847
    %v851 = vmul.f32 %v834, %v847
    %v852 = vmul.f32 %v839, %v847
    %v853 = vld [vmem:[%s14] sm:$0x1]
    %v855 = vlaneseq
    %v856 = vshrl.u32 %v855, 7
    %v857 = vsub.s32 0, %v856
    %v858 = vrot.slane %v853, %v857
    %v860 = vadd.f32 %v849, %v858
    %v861 = vadd.f32 %v850, %v858
    %v862 = vadd.f32 %v851, %v858
    %v863 = vadd.f32 %v852, %v858
    %v864 = vmax.f32 %v860, 0.0
    %v865 = vmax.f32 %v861, 0.0
    %v866 = vmax.f32 %v862, 0.0
    %v867 = vmax.f32 %v863, 0.0
    %v868 = vld [vmem:[%s15] sm:$0x1]
    %v870 = vlaneseq
    %v871 = vshrl.u32 %v870, 7
    %v872 = vsub.s32 0, %v871
    %v873 = vrot.slane %v868, %v872
    %v875 = vmul.f32 %v864, %v873
    %v876 = vmul.f32 %v865, %v873
    %v877 = vmul.f32 %v866, %v873
    %v878 = vmul.f32 %v867, %v873
    %879 = vadd.xlane.f32.xlu0 %v875
    %v880 = vpop.xlane.xlu0 %879
    %881 = vadd.xlane.f32.xlu0 %v876
    %v882 = vpop.xlane.xlu0 %881
    %883 = vadd.xlane.f32.xlu0 %v877
    %v884 = vpop.xlane.xlu0 %883
    %885 = vadd.xlane.f32.xlu0 %v878
    %v886 = vpop.xlane.xlu0 %885
    %v887 = vxor.u32 %v880, 2147483648
    %v888 = vxor.u32 %v882, 2147483648
    %v889 = vxor.u32 %v884, 2147483648
    %v890 = vxor.u32 %v886, 2147483648
    %v891 = vmul.f32 %v887, 1.442695
    %v892 = vpow.pop %v891
    %v893 = vmul.f32 %v888, 1.442695
    %v894 = vpow.pop %v893
    %v895 = vmul.f32 %v889, 1.442695
    %v896 = vpow.pop %v895
    %v897 = vmul.f32 %v890, 1.442695
    %v898 = vpow.pop %v897
    %v899 = vadd.f32 %v892, 1.0
    %v900 = vadd.f32 %v894, 1.0
    %v901 = vadd.f32 %v896, 1.0
    %v902 = vadd.f32 %v898, 1.0
    %v903 = vrcp.pop %v899
    %v904 = vmul.f32 1.0, %v903
    %v905 = vrcp.pop %v900
    %v906 = vmul.f32 1.0, %v905
    %v907 = vrcp.pop %v901
    %v908 = vmul.f32 1.0, %v907
    %v909 = vrcp.pop %v902
    %v910 = vmul.f32 1.0, %v909
    %v915 = vlaneseq
    %v916 = vand.u32 %v915, 127
    %v917 = vlaneseq
    %v918 = vshrl.u32 %v917, 7
    %v919 = vsub.s32 %v916, %v918
    %v920 = vrot.slane %v904, %v919
    %v921 = vadd.s32 %v916, 4294967288
    %v922 = vlaneseq
    %v923 = vshrl.u32 %v922, 7
    %v924 = vsub.s32 %v921, %v923
    %v925 = vrot.slane %v906, %v924
    %vm926 = vcmask 130112
    %v927 = vsel %vm926, %v925, %v920
    %v928 = vlaneseq
    %v929 = vshrl.u32 %v928, 7
    %v930 = vsub.s32 %v916, %v929
    %v931 = vrot.slane %v908, %v930
    %v932 = vlaneseq
    %v933 = vshrl.u32 %v932, 7
    %v934 = vsub.s32 %v921, %v933
    %v935 = vrot.slane %v910, %v934
    %v936 = vsel %vm926, %v935, %v931
    %v937 = vsel %vm436, %v936, %v927
    %vm939 = vcmask 123904
    %940 = vst.msk [vmem:[#allocation14] sm:$0x3] %vm939, %v937
    // Predicated region
    $region94: #{tpu_custom_call.1} parent=1 // pred_check
      _
    $region95: #{tpu_custom_call.1} parent=1 // pred_check_branch
      %942 = sbr.rel (0) target = $region97
    $region96: #{tpu_custom_call.1} parent=1 // pred_region
      %s944 = ssub.s32 32, 32
      %945 = vsyncadd [#allocation4], %s944
      %s947 = sshll.u32 [#allocation14], 4
      %s948 = int_to_ptr.vmem [resolvable:$true] %s947
      %950 = dma.vmem_to_hbm [thread:$0]  %s948, 32, %s16, [#allocation4]
    $region97: #{tpu_custom_call.1} parent=1 // pred_fallthru
      _
    // Predicated region
    $region98: #{tpu_custom_call.1} parent=1 // pred_check
      _
    $region99: #{tpu_custom_call.1} parent=1 // pred_check_branch
      %952 = sbr.rel (0) target = $region101
    $region100: #{tpu_custom_call.1} parent=1 // pred_region
      %953 = dma.done [#allocation4], 32
    $region101: #{tpu_custom_call.1} parent=1 // pred_fallthru
      _
    %954 = vsyncpa [#allocation3], 1
    %955 = vsyncpa [#allocation6], 1
    %956 = vsyncpa [#allocation9], 1
    %957 = vsyncpa [#allocation12], 1
    %958 = vsyncpa [#allocation4], 1

</llo_original>
